<compile_context>
chip_gen: v5e
topology: v5e:2x2
jax: 0.10.0
libtpu: 0.0.40
codegen_flags: <defaults>
</compile_context>

<pallas_src>
import jax
import jax.numpy as jnp
from jax.experimental import pallas as pl
from jax.experimental.pallas import tpu as pltpu


def _conv1x1_kernel(x_ref, w_ref, b_ref, o_ref):
    # x_ref: (C_in, TL)   w_ref: (TH, C_in)   b_ref: (TH, 1)   o_ref: (TH, TL)
    y = jnp.dot(w_ref[...], x_ref[...], preferred_element_type=jnp.float32)
    o_ref[...] = (y + b_ref[...]).astype(o_ref.dtype)


def _round_up(a, b):
    return ((a + b - 1) // b) * b


def encoder_embedding(x, weight, bias):
    """1x1 Conv1d forward.

    x:      (B, C_in, L)  float32
    weight: (H, C_in)     float32  (Conv1d weight squeezed over the kernel dim)
    bias:   (H,)          float32
    returns (B, H, L)     float32
    """
    B, C_in, L = x.shape
    H = weight.shape[0]
    itemsize = jnp.dtype(x.dtype).itemsize

    # ---- generation-aware VMEM budget --------------------------------------
    try:
        vmem_cap = pltpu.get_tpu_info().vmem_capacity_bytes
    except Exception:
        vmem_cap = 64 * 1024 * 1024  # conservative fallback (v7x per-TC)
    vmem_limit = min(int(0.75 * vmem_cap), 96 * 1024 * 1024)
    vmem_budget = vmem_limit // 2     # headroom for double buffers + weight/bias

    # ---- output-channel (H) tile -------------------------------------------
    if H <= 512:
        th = H
    elif H % 256 == 0:
        th = 256          # MXU-native on v6e/v7x
    elif H % 128 == 0:
        th = 128
    else:
        th = H

    # ---- lane tile (multiple of 128), derived from VMEM budget --------------
    lane = 128
    bytes_per_lane = 2 * (C_in + th) * itemsize   # double-buffered x-in + out
    tl_cap = max(lane, (vmem_budget // bytes_per_lane) // lane * lane)
    tl_cap = min(tl_cap, 32768)

    if L <= tl_cap:
        tl, L_pad = L, L                          # one lane tile; block == full dim
    else:
        tl = tl_cap
        L_pad = _round_up(L, tl)

    x_p = x if L_pad == L else jnp.pad(x, ((0, 0), (0, 0), (0, L_pad - L)))
    b2 = bias.reshape(H, 1)

    n_l = L_pad // tl
    n_h = H // th

    out = pl.pallas_call(
        _conv1x1_kernel,
        out_shape=jax.ShapeDtypeStruct((B, H, L_pad), x.dtype),
        grid_spec=pltpu.PrefetchScalarGridSpec(
            num_scalar_prefetch=0,
            grid=(B, n_l, n_h),   # H axis innermost: x tile stays resident across it
            in_specs=[
                # x: native (B, C_in, L) layout, batch squeezed out of the kernel ref
                pl.BlockSpec((pl.Squeezed(), C_in, tl), lambda b, i, h: (b, 0, i)),
                # weight / bias: VMEM-resident per H-tile (index independent of b, i)
                pl.BlockSpec((th, C_in), lambda b, i, h: (h, 0)),
                pl.BlockSpec((th, 1), lambda b, i, h: (h, 0)),
            ],
            out_specs=pl.BlockSpec(
                (pl.Squeezed(), th, tl), lambda b, i, h: (b, h, i)
            ),
        ),
        compiler_params=pltpu.CompilerParams(
            dimension_semantics=("parallel", "parallel", "parallel"),
            vmem_limit_bytes=vmem_limit,
        ),
    )(x_p, weight, b2)

    return out if L_pad == L else out[:, :, :L]


if __name__ == "__main__":
    # Small shapes consistent with the module: Conv1d(input_size -> hidden_size, k=1)
    B, C_IN, L, HIDDEN = 2, 4, 16, 32

    key = jax.random.PRNGKey(0)
    kx, kw, kb = jax.random.split(key, 3)

    x = jax.random.normal(kx, (B, C_IN, L), dtype=jnp.float32)

    # Deterministic parameter init mimicking PyTorch Conv1d's uniform(-bound, bound),
    # bound = 1/sqrt(fan_in) with fan_in = C_IN * kernel_size (=1).
    bound = 1.0 / (C_IN ** 0.5)
    weight = jax.random.uniform(kw, (HIDDEN, C_IN), jnp.float32, -bound, bound)
    bias = jax.random.uniform(kb, (HIDDEN,), jnp.float32, -bound, bound)

    out = encoder_embedding(x, weight, bias)
    out = jax.block_until_ready(out)

    # Pure-JAX reference check (Conv1d k=1 == einsum over channels + bias).
    ref = jnp.einsum("oc,bcl->bol", weight, x) + bias[None, :, None]
    assert out.shape == (B, HIDDEN, L)
    assert jnp.allclose(out, ref, atol=1e-5, rtol=1e-5)

    print("KERNEL_OK")
</pallas_src>

<mosaic_0001>
module attributes {stable_mosaic.version = 11 : i64} {
  func.func @_conv1x1_kernel(%arg0: i32, %arg1: i32, %arg2: i32, %arg3: memref<1x4x16xf32, #tpu.memory_space<vmem>>, %arg4: memref<32x4xf32, #tpu.memory_space<vmem>>, %arg5: memref<32x1xf32, #tpu.memory_space<vmem>>, %arg6: memref<1x32x16xf32, #tpu.memory_space<vmem>>) attributes {dimension_semantics = [#tpu.dimension_semantics<parallel>, #tpu.dimension_semantics<parallel>, #tpu.dimension_semantics<parallel>], iteration_bounds = array<i64: 2, 1, 1>, scalar_prefetch = 0 : i64, scratch_operands = 0 : i64, tpu.core_type = #tpu.core_type<tc>, window_params = [{transform_indices = @transform_0, window_bounds = array<i64: 1, 4, 16>}, {transform_indices = @transform_1, window_bounds = array<i64: 32, 4>}, {transform_indices = @transform_2, window_bounds = array<i64: 32, 1>}, {transform_indices = @transform_3, window_bounds = array<i64: 1, 32, 16>}]} {
    %c0 = arith.constant 0 : index
    %c0_0 = arith.constant 0 : index
    %0 = vector.load %arg4[%c0, %c0_0] : memref<32x4xf32, #tpu.memory_space<vmem>>, vector<32x4xf32>
    %c0_1 = arith.constant 0 : index
    %c0_2 = arith.constant 0 : index
    %c0_3 = arith.constant 0 : index
    %1 = vector.load %arg3[%c0_1, %c0_2, %c0_3] : memref<1x4x16xf32, #tpu.memory_space<vmem>>, vector<1x4x16xf32>
    %2 = vector.shape_cast %1 : vector<1x4x16xf32> to vector<4x16xf32>
    %cst = arith.constant dense<0.000000e+00> : vector<32x16xf32>
    %3 = tpu.matmul %0, %2, %cst {dimension_numbers = #tpu.dot_dimension_numbers<[1], [0], [0], [1], [0, 0, 1, 1], [], []>} : vector<32x4xf32>, vector<4x16xf32>, vector<32x16xf32> -> vector<32x16xf32>
    %c0_4 = arith.constant 0 : index
    %c0_5 = arith.constant 0 : index
    %4 = vector.load %arg5[%c0_4, %c0_5] : memref<32x1xf32, #tpu.memory_space<vmem>>, vector<32x1xf32>
    %5 = vector.broadcast %4 : vector<32x1xf32> to vector<32x16xf32>
    %6 = arith.addf %3, %5 : vector<32x16xf32>
    %c0_6 = arith.constant 0 : index
    %c0_7 = arith.constant 0 : index
    %c0_8 = arith.constant 0 : index
    %7 = vector.load %arg6[%c0_6, %c0_7, %c0_8] : memref<1x32x16xf32, #tpu.memory_space<vmem>>, vector<1x32x16xf32>
    %8 = vector.shape_cast %7 : vector<1x32x16xf32> to vector<32x16xf32>
    %9 = vector.shape_cast %6 : vector<32x16xf32> to vector<1x32x16xf32>
    tpu.vector_store %arg6[%c0_6, %c0_7, %c0_8], %9 {strides = array<i32>} : memref<1x32x16xf32, #tpu.memory_space<vmem>>, vector<1x32x16xf32>,
    return
  }
  func.func @transform_0(%arg0: i32, %arg1: i32, %arg2: i32) -> (i32, i32, i32) {
    %c0_i32 = arith.constant 0 : i32
    %c0_i32_0 = arith.constant 0 : i32
    return %arg0, %c0_i32, %arg1 : i32, i32, i32
  }
  func.func @transform_1(%arg0: i32, %arg1: i32, %arg2: i32) -> (i32, i32) {
    %c0_i32 = arith.constant 0 : i32
    %c0_i32_0 = arith.constant 0 : i32
    return %arg2, %c0_i32 : i32, i32
  }
  func.func @transform_2(%arg0: i32, %arg1: i32, %arg2: i32) -> (i32, i32) {
    %c0_i32 = arith.constant 0 : i32
    %c0_i32_0 = arith.constant 0 : i32
    return %arg2, %c0_i32 : i32, i32
  }
  func.func @transform_3(%arg0: i32, %arg1: i32, %arg2: i32) -> (i32, i32, i32) {
    %c0_i32 = arith.constant 0 : i32
    return %arg0, %arg2, %arg1 : i32, i32, i32
  }
}

</mosaic_0001>

<llo_original>
// kernel: tpu_custom_call.1
$region0: #{tpu_custom_call.1}
  #allocation0 [shape = 'u32[]', space=smem, size = 0x4, offset = 0x4, fixed_abs, tag = 'smem constant byte address 0x4 - core index']
  #allocation1 [shape = 'u32[72,128]{1,0:T(1,128)}', space=vmem, size = 0x9000, scoped, tag = 'internal scratch']
  %s0 = inlined_call_operand.vmem [shape: f32[2,4,16], index: 0, kind: input, shape index: {}]
  %s1 = inlined_call_operand.vmem [shape: f32[32,4], index: 1, kind: input, shape index: {}]
  %s2 = inlined_call_operand.vmem [shape: f32[32,1], index: 2, kind: input, shape index: {}]
  %s3 = inlined_call_operand.vmem [shape: f32[2,32,16], index: 3, kind: output, shape index: {}]
  %s4 = sld [smem:[#allocation0]]
  $region45: #{tpu_custom_call.1} parent=0
    _
  %s6 = ssub.s32 1, %s4
  %s7 = scalar_select 0, %s6, %s4
  loop: start=0, step=1, limit=4
  $region2: #{tpu_custom_call.1} parent=0 // loop_pre_header
    _
  $region3: #{tpu_custom_call.1} parent=0 // loop_header
    %s9 = sphi 0, %s13
    %p10 = scmp.ge.s32.totalorder %s9, 4
    %s16 = sphi 0, %s35
    %s17 = sphi 0, %s31
    %s18 = sphi 0, %s27
    %s19 = sphi 0, %s16
    %s20 = sphi 0, %s17
    %s21 = sphi 0, %s18
    %s22 = sphi 0, %s19
    %s23 = sphi 0, %s20
    %s24 = sphi 0, %s21
    %s40 = sphi 0, %s42
    %s43 = sphi 0, %s40
    %s44 = sphi 0, %s43
    %s60 = sphi 0, %s44
    %s66 = sphi 0, %s68
    %s69 = sphi 0, %s66
    %s70 = sphi 0, %s69
    %s86 = sphi 0, %s70
    %s92 = sphi 0, %s94
    %s95 = sphi 0, %s92
    %s96 = sphi 0, %s95
    %s112 = sphi 0, %s96
    %s122 = sphi 0, %s124
    %s125 = sphi 0, %s122
    %s126 = sphi 0, %s125
    %s142 = sphi 0, %s126
  $region4: #{tpu_custom_call.1} parent=0 // loop_header_branch
    %12 = sbr.rel (%p10) target = $region8
  $region5: #{tpu_custom_call.1} parent=0 // loop_body
    %s14 = ssub.s32 %s9, 1
    %s15 = ssub.s32 %s9, 2
    %s25 = sadd.s32 1, %s18
    %p26 = scmp.ge.s32.totalorder %s25, 1
    %s27 = scalar_select %p26, 0, %s25
    %s28 = sadd.s32 1, %s17
    %s29 = scalar_select %p26, %s28, %s17
    %p30 = scmp.ge.s32.totalorder %s29, 1
    %s31 = scalar_select %p30, 0, %s29
    %s32 = sadd.s32 1, %s16
    %s33 = scalar_select %p30, %s32, %s16
    %p34 = scmp.ge.s32.totalorder %s33, 2
    %s35 = scalar_select %p34, 0, %s33
    %s36 = ssub.s32 %s16, %s35
    %s37 = ssub.s32 %s17, %s31
    %s38 = sor.u32 %s36, %s37
    %p39 = scmp.eq.s32.totalorder %s38, 0
    %s41 = sadd.s32 %s40, 1
    %s42 = scalar_select %p39, %s40, %s41
    %p45 = pneg %p39
    %p46 = scmp.eq.s32.totalorder %s9, 1
    %p47 = por %p45, %p46
    %p48 = scmp.ne.s32.totalorder %s40, %s43
    %p49 = scmp.eq.s32.totalorder %s9, 0
    %p50 = por %p48, %p49
    %p51 = scmp.ne.s32.totalorder %s40, %s43
    %p52 = scmp.eq.s32.totalorder %s14, 1
    %p53 = por %p51, %p52
    %p54 = scmp.ne.s32.totalorder %s43, %s44
    %p55 = scmp.eq.s32.totalorder %s14, 0
    %p56 = por %p54, %p55
    %p57 = scmp.ne.s32.totalorder %s43, %s44
    %p58 = scmp.eq.s32.totalorder %s15, 1
    %p59 = por %p57, %p58
    %p61 = scmp.ne.s32.totalorder %s44, %s60
    %p62 = scmp.eq.s32.totalorder %s15, 0
    %p63 = por %p61, %p62
    %s64 = ssub.s32 %s18, %s27
    %p65 = scmp.eq.s32.totalorder %s64, 0
    %s67 = sadd.s32 %s66, 1
    %s68 = scalar_select %p65, %s66, %s67
    %p71 = pneg %p65
    %p72 = scmp.eq.s32.totalorder %s9, 1
    %p73 = por %p71, %p72
    %p74 = scmp.ne.s32.totalorder %s66, %s69
    %p75 = scmp.eq.s32.totalorder %s9, 0
    %p76 = por %p74, %p75
    %p77 = scmp.ne.s32.totalorder %s66, %s69
    %p78 = scmp.eq.s32.totalorder %s14, 1
    %p79 = por %p77, %p78
    %p80 = scmp.ne.s32.totalorder %s69, %s70
    %p81 = scmp.eq.s32.totalorder %s14, 0
    %p82 = por %p80, %p81
    %p83 = scmp.ne.s32.totalorder %s69, %s70
    %p84 = scmp.eq.s32.totalorder %s15, 1
    %p85 = por %p83, %p84
    %p87 = scmp.ne.s32.totalorder %s70, %s86
    %p88 = scmp.eq.s32.totalorder %s15, 0
    %p89 = por %p87, %p88
    %s90 = ssub.s32 %s18, %s27
    %p91 = scmp.eq.s32.totalorder %s90, 0
    %s93 = sadd.s32 %s92, 1
    %s94 = scalar_select %p91, %s92, %s93
    %p97 = pneg %p91
    %p98 = scmp.eq.s32.totalorder %s9, 1
    %p99 = por %p97, %p98
    %p100 = scmp.ne.s32.totalorder %s92, %s95
    %p101 = scmp.eq.s32.totalorder %s9, 0
    %p102 = por %p100, %p101
    %p103 = scmp.ne.s32.totalorder %s92, %s95
    %p104 = scmp.eq.s32.totalorder %s14, 1
    %p105 = por %p103, %p104
    %p106 = scmp.ne.s32.totalorder %s95, %s96
    %p107 = scmp.eq.s32.totalorder %s14, 0
    %p108 = por %p106, %p107
    %p109 = scmp.ne.s32.totalorder %s95, %s96
    %p110 = scmp.eq.s32.totalorder %s15, 1
    %p111 = por %p109, %p110
    %p113 = scmp.ne.s32.totalorder %s96, %s112
    %p114 = scmp.eq.s32.totalorder %s15, 0
    %p115 = por %p113, %p114
    %s116 = ssub.s32 %s16, %s35
    %s117 = ssub.s32 %s18, %s27
    %s118 = sor.u32 %s116, %s117
    %s119 = ssub.s32 %s17, %s31
    %s120 = sor.u32 %s118, %s119
    %p121 = scmp.eq.s32.totalorder %s120, 0
    %s123 = sadd.s32 %s122, 1
    %s124 = scalar_select %p121, %s122, %s123
    %p127 = pneg %p121
    %p128 = scmp.eq.s32.totalorder %s9, 1
    %p129 = por %p127, %p128
    %p130 = scmp.ne.s32.totalorder %s122, %s125
    %p131 = scmp.eq.s32.totalorder %s9, 0
    %p132 = por %p130, %p131
    %p133 = scmp.ne.s32.totalorder %s122, %s125
    %p134 = scmp.eq.s32.totalorder %s14, 1
    %p135 = por %p133, %p134
    %p136 = scmp.ne.s32.totalorder %s125, %s126
    %p137 = scmp.eq.s32.totalorder %s14, 0
    %p138 = por %p136, %p137
    %p139 = scmp.ne.s32.totalorder %s125, %s126
    %p140 = scmp.eq.s32.totalorder %s15, 1
    %p141 = por %p139, %p140
    %p143 = scmp.ne.s32.totalorder %s126, %s142
    %p144 = scmp.eq.s32.totalorder %s15, 0
    %p145 = por %p143, %p144
    %p146 = scmp.le.s32.totalorder 1, %s9
    %p147 = scmp.lt.s32.totalorder %s9, 3
    %p148 = pnand %p146, %p147
    %p149 = pneg %p148
    // Predicated region
    $region9: #{tpu_custom_call.1} parent=5 // pred_check
      _
    $region10: #{tpu_custom_call.1} parent=5 // pred_check_branch
      %151 = sbr.rel (%p148) target = $region12
    $region11: #{tpu_custom_call.1} parent=5 // pred_region
      %s152 = ssub.s32 %s9, 1
      // Predicated region
      $region13: #{tpu_custom_call.1} parent=11 // pred_check
        %p153 = pneg %p82
      $region14: #{tpu_custom_call.1} parent=11 // pred_check_branch
        %155 = sbr.rel (%p153) target = $region16
      $region15: #{tpu_custom_call.1} parent=11 // pred_region
        %s156 = smul.u32 4, %s21
        %p157 = scmp.lt.s32.totalorder %s156, 3
        %s158 = scalar_select %p157, %s156, 3
        %s159 = smul.addr %s158, 8
        %s160 = scalar_lea.vmem %s1, %s159
        %s161 = smul.u32 4, %s21
      $region16: #{tpu_custom_call.1} parent=11 // pred_fallthru
        _
      // Predicated region
      $region17: #{tpu_custom_call.1} parent=11 // pred_check
        %p162 = pneg %p108
      $region18: #{tpu_custom_call.1} parent=11 // pred_check_branch
        %164 = sbr.rel (%p162) target = $region20
      $region19: #{tpu_custom_call.1} parent=11 // pred_region
        %s165 = smul.u32 4, %s21
        %p166 = scmp.lt.s32.totalorder %s165, 3
        %s167 = scalar_select %p166, %s165, 3
        %s168 = smul.addr %s167, 8
        %s169 = scalar_lea.vmem %s2, %s168
        %s170 = smul.u32 4, %s21
      $region20: #{tpu_custom_call.1} parent=11 // pred_fallthru
        _
    $region12: #{tpu_custom_call.1} parent=5 // pred_fallthru
      _
    %p171 = scmp.lt.s32.totalorder %s9, 2
    // Predicated region
    $region21: #{tpu_custom_call.1} parent=5 // pred_check
      %p172 = pneg %p171
    $region22: #{tpu_custom_call.1} parent=5 // pred_check_branch
      %174 = sbr.rel (%p172) target = $region24
    $region23: #{tpu_custom_call.1} parent=5 // pred_region
      // Predicated region
      $region25: #{tpu_custom_call.1} parent=23 // pred_check
        %p175 = pneg %p50
      $region26: #{tpu_custom_call.1} parent=23 // pred_check_branch
        %177 = sbr.rel (%p175) target = $region28
      $region27: #{tpu_custom_call.1} parent=23 // pred_region
        %p178 = scmp.lt.s32.totalorder %s16, 1
        %s179 = scalar_select %p178, %s16, 1
        %p180 = scmp.lt.s32.totalorder %s17, 0
        %s181 = scalar_select %p180, %s17, 0
        %s182 = sadd.s32 %s181, %s179
        %s183 = smul.addr %s182, 4
        %s184 = scalar_lea.vmem %s0, %s183
      $region28: #{tpu_custom_call.1} parent=23 // pred_fallthru
        _
    $region24: #{tpu_custom_call.1} parent=5 // pred_fallthru
      _
    %p185 = scmp.le.s32.totalorder 1, %s9
    %p186 = scmp.lt.s32.totalorder %s9, 3
    %p187 = pnand %p185, %p186
    %p188 = pneg %p187
    // Predicated region
    $region29: #{tpu_custom_call.1} parent=5 // pred_check
      _
    $region30: #{tpu_custom_call.1} parent=5 // pred_check_branch
      %190 = sbr.rel (%p187) target = $region32
    $region31: #{tpu_custom_call.1} parent=5 // pred_region
      %s191 = ssub.s32 %s9, 1
      %p192 = scmp.lt.s32.totalorder %s19, 1
      %s193 = scalar_select %p192, %s19, 1
      %p194 = scmp.lt.s32.totalorder %s20, 0
      %s195 = scalar_select %p194, %s20, 0
      %s196 = sadd.s32 %s195, %s193
      %s197 = smul.addr %s196, 4
      %s198 = scalar_lea.vmem %s0, %s197
      %p199 = pneg %p56
      %p200 = pneg %p53
      %s201 = smul.u32 4, %s21
      %p202 = scmp.lt.s32.totalorder %s201, 3
      %s203 = scalar_select %p202, %s201, 3
      %s204 = smul.addr %s203, 8
      %s205 = scalar_lea.vmem %s1, %s204
      %p206 = pneg %p82
      %p207 = pneg %p79
      %s208 = smul.u32 4, %s21
      %p209 = scmp.lt.s32.totalorder %s208, 3
      %s210 = scalar_select %p209, %s208, 3
      %s211 = smul.addr %s210, 8
      %s212 = scalar_lea.vmem %s2, %s211
      %p213 = pneg %p108
      %p214 = pneg %p105
      %p215 = pneg %p138
      %p216 = pneg %p135
      %s217 = smul.u32 4, %s21
      %p218 = scmp.lt.s32.totalorder %s19, 1
      %s219 = scalar_select %p218, %s19, 1
      %p220 = scmp.lt.s32.totalorder %s217, 3
      %s221 = scalar_select %p220, %s217, 3
      %p222 = scmp.lt.s32.totalorder %s20, 0
      %s223 = scalar_select %p222, %s20, 0
      %s224 = sadd.s32 %s223, %s221
      %s225 = smul.addr %s219, 4
      %s226 = sadd.s32 %s224, %s225
      %s227 = smul.addr %s226, 8
      %s228 = scalar_lea.vmem %s3, %s227
      %p229 = scmp.lt.s32.totalorder %s19, 1
      %s230 = scalar_select %p229, %s19, 1
      %p231 = scmp.lt.s32.totalorder %s20, 0
      %s232 = scalar_select %p231, %s20, 0
      %s233 = sadd.s32 %s232, %s230
      %s234 = smul.addr %s233, 4
      %s235 = scalar_lea.vmem %s0, %s234
      %s236 = smul.u32 4, %s21
      %p237 = scmp.lt.s32.totalorder %s236, 3
      %s238 = scalar_select %p237, %s236, 3
      %s239 = smul.addr %s238, 8
      %s240 = scalar_lea.vmem %s1, %s239
      %s241 = smul.u32 4, %s21
      %s242 = smul.u32 4, %s21
      %p243 = scmp.lt.s32.totalorder %s242, 3
      %s244 = scalar_select %p243, %s242, 3
      %s245 = smul.addr %s244, 8
      %s246 = scalar_lea.vmem %s2, %s245
      %s247 = smul.u32 4, %s21
      %s248 = smul.u32 4, %s21
      %p249 = scmp.lt.s32.totalorder %s19, 1
      %s250 = scalar_select %p249, %s19, 1
      %p251 = scmp.lt.s32.totalorder %s248, 3
      %s252 = scalar_select %p251, %s248, 3
      %p253 = scmp.lt.s32.totalorder %s20, 0
      %s254 = scalar_select %p253, %s20, 0
      %s255 = sadd.s32 %s254, %s252
      %s256 = smul.addr %s250, 4
      %s257 = sadd.s32 %s255, %s256
      %s258 = smul.addr %s257, 8
      %s259 = scalar_lea.vmem %s3, %s258
      %s260 = smul.u32 4, %s21
      %v261 = vld [vmem:[%s240] sm:$0xff]
      %v262 = vld [vmem:[%s240 + $0x8] sm:$0xff]
      %v263 = vld [vmem:[%s240 + $0x10] sm:$0xff]
      %v264 = vld [vmem:[%s240 + $0x18] sm:$0xff]
      %v265 = vld [vmem:[%s235] sm:$0xf]
      %v266 = vld [vmem:[%s246] sm:$0xff]
      %v267 = vld [vmem:[%s246 + $0x8] sm:$0xff]
      %v268 = vld [vmem:[%s246 + $0x10] sm:$0xff]
      %v269 = vld [vmem:[%s246 + $0x18] sm:$0xff]
      %271 = vset.pattern.permute.xlu0 0
      %272 = vperm.xlu0 %271, %v266
      %v273 = vpop.permute.xlu0 %272
      %276 = vset.pattern.permute.xlu0 0
      %277 = vperm.xlu0 %276, %v267
      %v278 = vpop.permute.xlu0 %277
      %281 = vset.pattern.permute.xlu0 0
      %282 = vperm.xlu0 %281, %v268
      %v283 = vpop.permute.xlu0 %282
      %286 = vset.pattern.permute.xlu0 0
      %287 = vperm.xlu0 %286, %v269
      %v288 = vpop.permute.xlu0 %287
      %vm290 = vcmask 31744
      %v292 = vsel %vm290, %v261, 0
      %v295 = vsel %vm290, %v262, 0
      %v298 = vsel %vm290, %v263, 0
      %v301 = vsel %vm290, %v264, 0
      %vm303 = vcmask 1043456
      %v305 = vsel %vm303, %v265, 0
      %307 = vmatpush.msra.mxu0 0.0
      %308 = vmatpush.msra.mxu0 0.0
      %309 = vmatpush.msra.mxu0 0.0
      %310 = vmatpush.msra.mxu0 0.0
      %311 = vmatpush.msra.mxu0 0.0
      %312 = vmatpush.msra.mxu0 0.0
      %313 = vmatpush.msra.mxu0 0.0
      %314 = vmatpush.msra.mxu0 0.0
      %315 = vmatpush.msra.mxu0 0.0
      %316 = vmatpush.msra.mxu0 0.0
      %317 = vmatpush.msra.mxu0 0.0
      %318 = vmatpush.msra.mxu0 0.0
      %319 = vmatpush.msra.mxu0 0.0
      %320 = vmatpush.msra.mxu0 0.0
      %321 = vmatpush.msra.mxu0 0.0
      %322 = vmatpush.msra.mxu0 %v305
      %323 = vmatmul.f32.gmra.mxu0 %v292
      %v324 = vpop.f32.mrf.mxu0
      %v325 = vadd.f32 %v273, %v324
      %326 = vmatmul.f32.gmra.mxu0 %v295
      %v327 = vpop.f32.mrf.mxu0
      %v328 = vadd.f32 %v278, %v327
      %329 = vmatmul.f32.gmra.mxu0 %v298
      %v330 = vpop.f32.mrf.mxu0
      %v331 = vadd.f32 %v283, %v330
      %332 = vmatmul.f32.gmra.mxu0 %v301
      %v333 = vpop.f32.mrf.mxu0
      %v334 = vadd.f32 %v288, %v333
      %335 = vdwg.mxu0
      %vm336 = vcmask 130048
      %337 = vst.msk [vmem:[%s259] sm:$0xff] %vm336, %v325
      %338 = vst.msk [vmem:[%s259 + $0x8] sm:$0xff] %vm336, %v328
      %339 = vst.msk [vmem:[%s259 + $0x10] sm:$0xff] %vm336, %v331
      %340 = vst.msk [vmem:[%s259 + $0x18] sm:$0xff] %vm336, %v334
      %s341 = smul.u32 4, %s21
      %p342 = scmp.lt.s32.totalorder %s19, 1
      %s343 = scalar_select %p342, %s19, 1
      %p344 = scmp.lt.s32.totalorder %s341, 3
      %s345 = scalar_select %p344, %s341, 3
      %p346 = scmp.lt.s32.totalorder %s20, 0
      %s347 = scalar_select %p346, %s20, 0
      %s348 = sadd.s32 %s347, %s345
      %s349 = smul.addr %s343, 4
      %s350 = sadd.s32 %s348, %s349
      %s351 = smul.addr %s350, 8
      %s352 = scalar_lea.vmem %s3, %s351
      // Predicated region
      $region33: #{tpu_custom_call.1} parent=31 // pred_check
        %p353 = pneg %p135
      $region34: #{tpu_custom_call.1} parent=31 // pred_check_branch
        %355 = sbr.rel (%p353) target = $region36
      $region35: #{tpu_custom_call.1} parent=31 // pred_region
        %s356 = smul.u32 4, %s21
      $region36: #{tpu_custom_call.1} parent=31 // pred_fallthru
        _
    $region32: #{tpu_custom_call.1} parent=5 // pred_fallthru
      _
    %p357 = scmp.le.s32.totalorder 2, %s9
    // Predicated region
    $region37: #{tpu_custom_call.1} parent=5 // pred_check
      %p358 = pneg %p357
    $region38: #{tpu_custom_call.1} parent=5 // pred_check_branch
      %360 = sbr.rel (%p358) target = $region40
    $region39: #{tpu_custom_call.1} parent=5 // pred_region
      %s361 = ssub.s32 %s9, 2
      // Predicated region
      $region41: #{tpu_custom_call.1} parent=39 // pred_check
        %p362 = pneg %p141
      $region42: #{tpu_custom_call.1} parent=39 // pred_check_branch
        %364 = sbr.rel (%p362) target = $region44
      $region43: #{tpu_custom_call.1} parent=39 // pred_region
        %s365 = smul.u32 4, %s24
        %p366 = scmp.lt.s32.totalorder %s22, 1
        %s367 = scalar_select %p366, %s22, 1
        %p368 = scmp.lt.s32.totalorder %s365, 3
        %s369 = scalar_select %p368, %s365, 3
        %p370 = scmp.lt.s32.totalorder %s23, 0
        %s371 = scalar_select %p370, %s23, 0
        %s372 = sadd.s32 %s371, %s369
        %s373 = smul.addr %s367, 4
        %s374 = sadd.s32 %s372, %s373
        %s375 = smul.addr %s374, 8
        %s376 = scalar_lea.vmem %s3, %s375
      $region44: #{tpu_custom_call.1} parent=39 // pred_fallthru
        _
    $region40: #{tpu_custom_call.1} parent=5 // pred_fallthru
      _
  $region6: #{tpu_custom_call.1} parent=0 // loop_footer
    %s13 = sadd.s32 1, %s9
  $region7: #{tpu_custom_call.1} parent=0 // loop_footer_branch
    %8 = sbr.rel target = $region3
  $region8: #{tpu_custom_call.1} parent=0 // loop_exit
    _

</llo_original>
